<compile_context>
chip_gen: v6e
topology: v6e:2x2x1
jax: 0.10.0
libtpu: 0.0.40
codegen_flags: <defaults>
</compile_context>

<pallas_src>
import functools

import jax
import jax.numpy as jnp
from jax.experimental import pallas as pl
from jax.experimental.pallas import tpu as pltpu


def _round_up(x, m):
    return (x + m - 1) // m * m


def _vmem_limit_bytes():
    """~85% of this generation's per-core VMEM, leaving Mosaic headroom."""
    cap = 128 * 1024 * 1024  # v5e/v6e default if query is unavailable
    try:
        info = pltpu.get_tpu_info()
        cap = int(getattr(info, "vmem_capacity_bytes", cap))
    except Exception:
        pass
    return int(cap * 0.85)


def _ffn_kernel(x_ref, w1_ref, b1_ref, w2_ref, b2_ref, o_ref, acc_ref):
    # x_ref : (TM, dim_p)    VMEM, double-buffered along the M grid axis
    # w1_ref: (dim_p, HC)    VMEM, streamed per hidden chunk
    # b1_ref: (1, HC)        VMEM, streamed per hidden chunk
    # w2_ref: (HC, dim_p)    VMEM, streamed per hidden chunk
    # b2_ref: (1, dim_p)     VMEM, constant block across the grid
    # o_ref : (TM, dim_p)    written once, on the last hidden chunk
    # acc_ref: (TM, dim_p) f32 scratch accumulator
    k = pl.program_id(1)

    @pl.when(k == 0)
    def _init():
        acc_ref[...] = jnp.zeros_like(acc_ref)

    # Linear 1 on this hidden chunk: native-dtype operands, f32 MXU accumulate.
    h = jnp.dot(x_ref[...], w1_ref[...], preferred_element_type=jnp.float32)
    h = h + b1_ref[...].astype(jnp.float32)

    # Exact GELU (erf-based), matching torch.nn.GELU() default, in f32.
    h = 0.5 * h * (1.0 + jax.lax.erf(h * jnp.float32(0.7071067811865476)))

    # Dropout(p=0.0) is identity in the forward pass -> no-op.

    # Cast back to weight dtype so Linear 2 is a cheap MXU pass
    # (bf16-in / f32-acc when weights are bf16; no-op for f32 weights).
    h = h.astype(w2_ref.dtype)
    acc_ref[...] += jnp.dot(h, w2_ref[...], preferred_element_type=jnp.float32)

    @pl.when(k == pl.num_programs(1) - 1)
    def _store():
        o_ref[...] = (acc_ref[...] + b2_ref[...].astype(jnp.float32)).astype(
            o_ref.dtype
        )


@functools.partial(jax.jit, static_argnames=("block_m", "block_h"))
def feed_forward(x, w1, b1, w2, b2, *, block_m=512, block_h=512):
    """x: (batch, seq, dim); weights stored as (in, out) so kernel does x @ W.

    block_m: token-tile size (rows per grid step).
    block_h: hidden-chunk size (columns of W1 / rows of W2 per grid step);
             bounds VMEM and the live f32 intermediate to (block_m, block_h).
    """
    batch, seq, dim = x.shape
    hidden = w1.shape[1]
    m = batch * seq

    # Lane-dense padding: features to multiples of 128, tokens to the tile,
    # hidden to a multiple of the hidden chunk (zeros -> mathematical no-op).
    dim_p = _round_up(dim, 128)
    block_h = _round_up(block_h, 128)
    hc = min(_round_up(hidden, 128), block_h)
    hid_p = _round_up(hidden, hc)
    tm = min(block_m, _round_up(m, 8))
    m_p = _round_up(m, tm)

    x2d = x.reshape(m, dim)
    x2d = jnp.pad(x2d, ((0, m_p - m), (0, dim_p - dim)))
    w1p = jnp.pad(w1, ((0, dim_p - dim), (0, hid_p - hidden)))
    b1p = jnp.pad(b1.reshape(1, -1), ((0, 0), (0, hid_p - hidden)))
    w2p = jnp.pad(w2, ((0, hid_p - hidden), (0, dim_p - dim)))
    b2p = jnp.pad(b2.reshape(1, -1), ((0, 0), (0, dim_p - dim)))

    num_m_tiles = m_p // tm
    num_h_chunks = hid_p // hc

    # Advisory cost hint for XLA scheduling around the custom call.  With a
    # chunked hidden axis the weight blocks are re-streamed once per M tile.
    weight_bytes = (
        w1p.size * w1p.dtype.itemsize
        + b1p.size * b1p.dtype.itemsize
        + w2p.size * w2p.dtype.itemsize
        + b2p.size * b2p.dtype.itemsize
    )
    weight_reads = 1 if num_h_chunks == 1 else num_m_tiles
    bytes_accessed = (
        x2d.size * x2d.dtype.itemsize
        + weight_bytes * weight_reads
        + m_p * dim_p * x.dtype.itemsize
    )
    cost = pl.CostEstimate(
        flops=4 * m * dim * hidden,       # two matmuls, 2*M*D*H each
        transcendentals=m * hidden,       # erf per hidden activation
        bytes_accessed=bytes_accessed,
    )

    out2d = pl.pallas_call(
        _ffn_kernel,
        out_shape=jax.ShapeDtypeStruct((m_p, dim_p), x.dtype),
        grid_spec=pltpu.PrefetchScalarGridSpec(
            num_scalar_prefetch=0,
            grid=(num_m_tiles, num_h_chunks),
            in_specs=[
                pl.BlockSpec((tm, dim_p), lambda i, k: (i, 0)),    # x tile
                pl.BlockSpec((dim_p, hc), lambda i, k: (0, k)),    # W1 chunk
                pl.BlockSpec((1, hc), lambda i, k: (0, k)),        # b1 chunk
                pl.BlockSpec((hc, dim_p), lambda i, k: (k, 0)),    # W2 chunk
                pl.BlockSpec((1, dim_p), lambda i, k: (0, 0)),     # b2 resident
            ],
            out_specs=pl.BlockSpec((tm, dim_p), lambda i, k: (i, 0)),
            scratch_shapes=[pltpu.VMEM((tm, dim_p), jnp.float32)],  # f32 acc
        ),
        compiler_params=pltpu.CompilerParams(
            # Row tiles shard over v7x's 2 TCs; hidden is a reduction.
            dimension_semantics=("parallel", "arbitrary"),
            vmem_limit_bytes=_vmem_limit_bytes(),
        ),
        cost_estimate=cost,
    )(x2d, w1p, b1p, w2p, b2p)

    out2d = out2d[:m, :dim]
    return out2d.reshape(batch, seq, dim)


def feed_forward_ref(x, w1, b1, w2, b2):
    """Pure-JAX reference mirroring the PyTorch module (dropout p=0)."""
    h = jnp.dot(x, w1) + b1
    h = 0.5 * h * (1.0 + jax.lax.erf(h / jnp.sqrt(2.0)))
    return jnp.dot(h, w2) + b2


def _make_params(key, dim, hidden):
    kw1, kb1, kw2, kb2 = jax.random.split(key, 4)
    bound1 = 1.0 / jnp.sqrt(dim)
    bound2 = 1.0 / jnp.sqrt(hidden)
    # Stored as (in, out) so the kernel computes x @ W (equivalent to
    # PyTorch's x @ W.T with W of shape (out, in)).
    w1 = jax.random.uniform(kw1, (dim, hidden), jnp.float32, -bound1, bound1)
    b1 = jax.random.uniform(kb1, (1, hidden), jnp.float32, -bound1, bound1)
    w2 = jax.random.uniform(kw2, (hidden, dim), jnp.float32, -bound2, bound2)
    b2 = jax.random.uniform(kb2, (1, dim), jnp.float32, -bound2, bound2)
    return w1, b1, w2, b2


if __name__ == "__main__":
    key = jax.random.PRNGKey(0)
    k1, k2, k3, k4 = jax.random.split(key, 4)

    # Case 1: small transformer FFN block, single hidden chunk.
    batch, seq, dim, hidden = 2, 8, 32, 64
    x = jax.random.normal(k1, (batch, seq, dim), dtype=jnp.float32)
    w1, b1, w2, b2 = _make_params(k2, dim, hidden)
    out = jax.block_until_ready(feed_forward(x, w1, b1, w2, b2))
    ref = feed_forward_ref(x, w1, b1[0], w2, b2[0])
    assert out.shape == (batch, seq, dim)
    assert jnp.allclose(out, ref, atol=1e-5, rtol=1e-5), "mismatch (case 1)"

    # Case 2: exercise multiple M tiles and multiple hidden chunks
    # (accumulator init / accumulate / finalize path).
    batch2, seq2, dim2, hidden2 = 2, 8, 32, 384
    x2 = jax.random.normal(k3, (batch2, seq2, dim2), dtype=jnp.float32)
    w1b, b1b, w2b, b2b = _make_params(k4, dim2, hidden2)
    out2 = jax.block_until_ready(
        feed_forward(x2, w1b, b1b, w2b, b2b, block_m=8, block_h=128)
    )
    ref2 = feed_forward_ref(x2, w1b, b1b[0], w2b, b2b[0])
    assert out2.shape == (batch2, seq2, dim2)
    assert jnp.allclose(out2, ref2, atol=1e-5, rtol=1e-5), "mismatch (case 2)"

    print("KERNEL_OK")
</pallas_src>

<mosaic_0001>
module attributes {stable_mosaic.version = 11 : i64} {
  func.func @_ffn_kernel(%arg0: i32, %arg1: i32, %arg2: memref<16x128xf32, #tpu.memory_space<vmem>>, %arg3: memref<128x128xf32, #tpu.memory_space<vmem>>, %arg4: memref<1x128xf32, #tpu.memory_space<vmem>>, %arg5: memref<128x128xf32, #tpu.memory_space<vmem>>, %arg6: memref<1x128xf32, #tpu.memory_space<vmem>>, %arg7: memref<16x128xf32, #tpu.memory_space<vmem>>, %arg8: memref<16x128xf32, #tpu.memory_space<vmem>>) attributes {dimension_semantics = [#tpu.dimension_semantics<parallel>, #tpu.dimension_semantics<arbitrary>], iteration_bounds = array<i64: 1, 1>, scalar_prefetch = 0 : i64, scratch_operands = 1 : i64, tpu.core_type = #tpu.core_type<tc>, window_params = [{transform_indices = @transform_0, window_bounds = array<i64: 16, 128>}, {transform_indices = @transform_1, window_bounds = array<i64: 128, 128>}, {transform_indices = @transform_2, window_bounds = array<i64: 1, 128>}, {transform_indices = @transform_3, window_bounds = array<i64: 128, 128>}, {pipeline_mode = #tpu.pipeline_mode<synchronous>, transform_indices = @transform_4, window_bounds = array<i64: 1, 128>}, {transform_indices = @transform_5, window_bounds = array<i64: 16, 128>}]} {
    %c0_i32 = arith.constant 0 : i32
    %0 = arith.cmpi eq, %arg1, %c0_i32 : i32
    %1 = arith.extui %0 : i1 to i32
    %c0_i32_0 = arith.constant 0 : i32
    %2 = arith.cmpi ne, %1, %c0_i32_0 : i32
    scf.if %2 {
      %cst_18 = arith.constant 0.000000e+00 : f32
      %25 = vector.broadcast %cst_18 : f32 to vector<16x128xf32>
      %c0_19 = arith.constant 0 : index
      %c0_20 = arith.constant 0 : index
      %26 = vector.load %arg8[%c0_19, %c0_20] : memref<16x128xf32, #tpu.memory_space<vmem>>, vector<16x128xf32>
      tpu.vector_store %arg8[%c0_19, %c0_20], %25 {strides = array<i32>} : memref<16x128xf32, #tpu.memory_space<vmem>>, vector<16x128xf32>,
    } else {
    }
    %c0 = arith.constant 0 : index
    %c0_1 = arith.constant 0 : index
    %3 = vector.load %arg2[%c0, %c0_1] : memref<16x128xf32, #tpu.memory_space<vmem>>, vector<16x128xf32>
    %c0_2 = arith.constant 0 : index
    %c0_3 = arith.constant 0 : index
    %4 = vector.load %arg3[%c0_2, %c0_3] : memref<128x128xf32, #tpu.memory_space<vmem>>, vector<128x128xf32>
    %cst = arith.constant dense<0.000000e+00> : vector<16x128xf32>
    %5 = tpu.matmul %3, %4, %cst {dimension_numbers = #tpu.dot_dimension_numbers<[1], [0], [0], [1], [0, 0, 1, 1], [], []>} : vector<16x128xf32>, vector<128x128xf32>, vector<16x128xf32> -> vector<16x128xf32>
    %c0_4 = arith.constant 0 : index
    %c0_5 = arith.constant 0 : index
    %6 = vector.load %arg4[%c0_4, %c0_5] : memref<1x128xf32, #tpu.memory_space<vmem>>, vector<1x128xf32>
    %7 = vector.broadcast %6 : vector<1x128xf32> to vector<16x128xf32>
    %8 = arith.addf %5, %7 : vector<16x128xf32>
    %cst_6 = arith.constant 5.000000e-01 : f32
    %9 = vector.broadcast %cst_6 : f32 to vector<16x128xf32>
    %10 = arith.mulf %9, %8 : vector<16x128xf32>
    %cst_7 = arith.constant 0.707106769 : f32
    %11 = vector.broadcast %cst_7 : f32 to vector<16x128xf32>
    %12 = arith.mulf %8, %11 : vector<16x128xf32>
    %13 = math.erf %12 : vector<16x128xf32>
    %cst_8 = arith.constant 1.000000e+00 : f32
    %14 = vector.broadcast %cst_8 : f32 to vector<16x128xf32>
    %15 = arith.addf %14, %13 : vector<16x128xf32>
    %16 = arith.mulf %10, %15 : vector<16x128xf32>
    %c0_9 = arith.constant 0 : index
    %c0_10 = arith.constant 0 : index
    %17 = vector.load %arg8[%c0_9, %c0_10] : memref<16x128xf32, #tpu.memory_space<vmem>>, vector<16x128xf32>
    %c0_11 = arith.constant 0 : index
    %c0_12 = arith.constant 0 : index
    %18 = vector.load %arg5[%c0_11, %c0_12] : memref<128x128xf32, #tpu.memory_space<vmem>>, vector<128x128xf32>
    %cst_13 = arith.constant dense<0.000000e+00> : vector<16x128xf32>
    %19 = tpu.matmul %16, %18, %cst_13 {dimension_numbers = #tpu.dot_dimension_numbers<[1], [0], [0], [1], [0, 0, 1, 1], [], []>} : vector<16x128xf32>, vector<128x128xf32>, vector<16x128xf32> -> vector<16x128xf32>
    %20 = arith.addf %17, %19 : vector<16x128xf32>
    %c0_14 = arith.constant 0 : index
    %c0_15 = arith.constant 0 : index
    %21 = vector.load %arg8[%c0_14, %c0_15] : memref<16x128xf32, #tpu.memory_space<vmem>>, vector<16x128xf32>
    tpu.vector_store %arg8[%c0_14, %c0_15], %20 {strides = array<i32>} : memref<16x128xf32, #tpu.memory_space<vmem>>, vector<16x128xf32>,
    %c0_i32_16 = arith.constant 0 : i32
    %22 = arith.cmpi eq, %arg1, %c0_i32_16 : i32
    %23 = arith.extui %22 : i1 to i32
    %c0_i32_17 = arith.constant 0 : i32
    %24 = arith.cmpi ne, %23, %c0_i32_17 : i32
    scf.if %24 {
      %c0_18 = arith.constant 0 : index
      %c0_19 = arith.constant 0 : index
      %25 = vector.load %arg8[%c0_18, %c0_19] : memref<16x128xf32, #tpu.memory_space<vmem>>, vector<16x128xf32>
      %c0_20 = arith.constant 0 : index
      %c0_21 = arith.constant 0 : index
      %26 = vector.load %arg6[%c0_20, %c0_21] : memref<1x128xf32, #tpu.memory_space<vmem>>, vector<1x128xf32>
      %27 = vector.broadcast %26 : vector<1x128xf32> to vector<16x128xf32>
      %28 = arith.addf %25, %27 : vector<16x128xf32>
      %c0_22 = arith.constant 0 : index
      %c0_23 = arith.constant 0 : index
      %29 = vector.load %arg7[%c0_22, %c0_23] : memref<16x128xf32, #tpu.memory_space<vmem>>, vector<16x128xf32>
      tpu.vector_store %arg7[%c0_22, %c0_23], %28 {strides = array<i32>} : memref<16x128xf32, #tpu.memory_space<vmem>>, vector<16x128xf32>,
    } else {
    }
    return
  }
  func.func @transform_0(%arg0: i32, %arg1: i32) -> (i32, i32) {
    %c0_i32 = arith.constant 0 : i32
    %c0_i32_0 = arith.constant 0 : i32
    return %arg0, %c0_i32 : i32, i32
  }
  func.func @transform_1(%arg0: i32, %arg1: i32) -> (i32, i32) {
    %c0_i32 = arith.constant 0 : i32
    %c0_i32_0 = arith.constant 0 : i32
    return %c0_i32, %arg1 : i32, i32
  }
  func.func @transform_2(%arg0: i32, %arg1: i32) -> (i32, i32) {
    %c0_i32 = arith.constant 0 : i32
    %c0_i32_0 = arith.constant 0 : i32
    return %c0_i32, %arg1 : i32, i32
  }
  func.func @transform_3(%arg0: i32, %arg1: i32) -> (i32, i32) {
    %c0_i32 = arith.constant 0 : i32
    %c0_i32_0 = arith.constant 0 : i32
    return %arg1, %c0_i32 : i32, i32
  }
  func.func @transform_4(%arg0: i32, %arg1: i32) -> (i32, i32) {
    %c0_i32 = arith.constant 0 : i32
    %c0_i32_0 = arith.constant 0 : i32
    %c0_i32_1 = arith.constant 0 : i32
    return %c0_i32, %c0_i32_0 : i32, i32
  }
  func.func @transform_5(%arg0: i32, %arg1: i32) -> (i32, i32) {
    %c0_i32 = arith.constant 0 : i32
    %c0_i32_0 = arith.constant 0 : i32
    return %arg0, %c0_i32 : i32, i32
  }
}

</mosaic_0001>

<llo_original>
// kernel: feed_forward.1
$region0: #{feed_forward.1}
  #allocation0 [shape = 'u32[]', space=smem, size = 0x4, offset = 0x4, fixed_abs, tag = 'smem constant byte address 0x4 - core index']
  #allocation1 [shape = 'u32[144,128]{1,0:T(1,128)}', space=vmem, size = 0x12000, scoped, tag = 'internal scratch']
  #allocation2 [shape = 'f32[16,128]{1,0:T(8,128)}', space=vmem, size = 0x2000, scoped, tag = 'scratch operand']
  %s0 = inlined_call_operand.vmem [shape: f32[16,128], index: 0, kind: input, shape index: {}]
  %s1 = inlined_call_operand.vmem [shape: f32[128,128], index: 1, kind: input, shape index: {}]
  %s2 = inlined_call_operand.vmem [shape: f32[1,128], index: 2, kind: input, shape index: {}]
  %s3 = inlined_call_operand.vmem [shape: f32[128,128], index: 3, kind: input, shape index: {}]
  %s4 = inlined_call_operand.vmem [shape: f32[1,128], index: 4, kind: input, shape index: {}]
  %s5 = inlined_call_operand.vmem [shape: f32[16,128], index: 5, kind: output, shape index: {}]
  %s6 = sld [smem:[#allocation0]]
  $region38: #{feed_forward.1} parent=0
    _
  %s8 = ssub.s32 1, %s6
  %s9 = scalar_select 0, %s8, %s6
  // Predicated region
  $region2: #{feed_forward.1} parent=0 // pred_check
    _
  $region3: #{feed_forward.1} parent=0 // pred_check_branch
    %11 = sbr.rel (0) target = $region5
  $region4: #{feed_forward.1} parent=0 // pred_region
    _
  $region5: #{feed_forward.1} parent=0 // pred_fallthru
    _
  // Predicated region
  $region6: #{feed_forward.1} parent=0 // pred_check
    _
  $region7: #{feed_forward.1} parent=0 // pred_check_branch
    %13 = sbr.rel (0) target = $region9
  $region8: #{feed_forward.1} parent=0 // pred_region
    _
  $region9: #{feed_forward.1} parent=0 // pred_fallthru
    _
  // Predicated region
  $region10: #{feed_forward.1} parent=0 // pred_check
    _
  $region11: #{feed_forward.1} parent=0 // pred_check_branch
    %15 = sbr.rel (0) target = $region13
  $region12: #{feed_forward.1} parent=0 // pred_region
    _
  $region13: #{feed_forward.1} parent=0 // pred_fallthru
    _
  // Predicated region
  $region14: #{feed_forward.1} parent=0 // pred_check
    _
  $region15: #{feed_forward.1} parent=0 // pred_check_branch
    %17 = sbr.rel (0) target = $region17
  $region16: #{feed_forward.1} parent=0 // pred_region
    _
  $region17: #{feed_forward.1} parent=0 // pred_fallthru
    _
  // Predicated region
  $region18: #{feed_forward.1} parent=0 // pred_check
    _
  $region19: #{feed_forward.1} parent=0 // pred_check_branch
    %19 = sbr.rel (0) target = $region21
  $region20: #{feed_forward.1} parent=0 // pred_region
    _
  $region21: #{feed_forward.1} parent=0 // pred_fallthru
    _
  %p20 = scmp.eq.s32.totalorder 0, 0
  // Predicated region
  $region22: #{feed_forward.1} parent=0 // pred_check
    %p21 = pneg %p20
  $region23: #{feed_forward.1} parent=0 // pred_check_branch
    %23 = sbr.rel (%p21) target = $region25
  $region24: #{feed_forward.1} parent=0 // pred_region
    %24 = vst [vmem:[#allocation2] sm:$0xff] 0.0
    %25 = vst [vmem:[#allocation2 + $0x8] sm:$0xff] 0.0
  $region25: #{feed_forward.1} parent=0 // pred_fallthru
    _
  %v26 = vld [vmem:[%s0] sm:$0xff]
  %v27 = vld [vmem:[%s0 + $0x8] sm:$0xff]
  %v28 = vld [vmem:[%s1] sm:$0xff]
  %v29 = vld [vmem:[%s1 + $0x8] sm:$0xff]
  %v30 = vld [vmem:[%s1 + $0x10] sm:$0xff]
  %v31 = vld [vmem:[%s1 + $0x18] sm:$0xff]
  %v32 = vld [vmem:[%s1 + $0x20] sm:$0xff]
  %v33 = vld [vmem:[%s1 + $0x28] sm:$0xff]
  %v34 = vld [vmem:[%s1 + $0x30] sm:$0xff]
  %v35 = vld [vmem:[%s1 + $0x38] sm:$0xff]
  %v36 = vld [vmem:[%s1 + $0x40] sm:$0xff]
  %v37 = vld [vmem:[%s1 + $0x48] sm:$0xff]
  %v38 = vld [vmem:[%s1 + $0x50] sm:$0xff]
  %v39 = vld [vmem:[%s1 + $0x58] sm:$0xff]
  %v40 = vld [vmem:[%s1 + $0x60] sm:$0xff]
  %v41 = vld [vmem:[%s1 + $0x68] sm:$0xff]
  %v42 = vld [vmem:[%s1 + $0x70] sm:$0xff]
  %v43 = vld [vmem:[%s1 + $0x78] sm:$0xff]
  %v44 = vld [vmem:[%s2] sm:$0x1]
  %v46 = vlaneseq
  %v47 = vshrl.u32 %v46, 7
  %v48 = vsub.s32 0, %v47
  %v49 = vrot.slane %v44, %v48
  %51 = vmatprep.subr.mxu0 0.0
  %52 = vmatpush1.msra.mxu0 %v43
  %53 = vmatprep.subr.mxu0 0.0
  %54 = vmatpush1.msra.mxu0 %v42
  %55 = vmatprep.subr.mxu0 0.0
  %56 = vmatpush1.msra.mxu0 %v41
  %57 = vmatprep.subr.mxu0 0.0
  %58 = vmatpush1.msra.mxu0 %v40
  %59 = vmatprep.subr.mxu0 0.0
  %60 = vmatpush1.msra.mxu0 %v39
  %61 = vmatprep.subr.mxu0 0.0
  %62 = vmatpush1.msra.mxu0 %v38
  %63 = vmatprep.subr.mxu0 0.0
  %64 = vmatpush1.msra.mxu0 %v37
  %65 = vmatprep.subr.mxu0 0.0
  %66 = vmatpush1.msra.mxu0 %v36
  %67 = vmatprep.subr.mxu0 0.0
  %68 = vmatpush1.msra.mxu0 %v35
  %69 = vmatprep.subr.mxu0 0.0
  %70 = vmatpush1.msra.mxu0 %v34
  %71 = vmatprep.subr.mxu0 0.0
  %72 = vmatpush1.msra.mxu0 %v33
  %73 = vmatprep.subr.mxu0 0.0
  %74 = vmatpush1.msra.mxu0 %v32
  %75 = vmatprep.subr.mxu0 0.0
  %76 = vmatpush1.msra.mxu0 %v31
  %77 = vmatprep.subr.mxu0 0.0
  %78 = vmatpush1.msra.mxu0 %v30
  %79 = vmatprep.subr.mxu0 0.0
  %80 = vmatpush1.msra.mxu0 %v29
  %81 = vmatprep.subr.mxu0 0.0
  %82 = vmatpush1.msra.mxu0 %v28
  %83 = vmatprep.subr.mxu0 0.0
  %84 = vmatpush2.msra.mxu0 0.0
  %85 = vmatprep.subr.mxu0 0.0
  %86 = vmatpush2.msra.mxu0 0.0
  %87 = vmatprep.subr.mxu0 0.0
  %88 = vmatpush2.msra.mxu0 0.0
  %89 = vmatprep.subr.mxu0 0.0
  %90 = vmatpush2.msra.mxu0 0.0
  %91 = vmatprep.subr.mxu0 0.0
  %92 = vmatpush2.msra.mxu0 0.0
  %93 = vmatprep.subr.mxu0 0.0
  %94 = vmatpush2.msra.mxu0 0.0
  %95 = vmatprep.subr.mxu0 0.0
  %96 = vmatpush2.msra.mxu0 0.0
  %97 = vmatprep.subr.mxu0 0.0
  %98 = vmatpush2.msra.mxu0 0.0
  %99 = vmatprep.subr.mxu0 0.0
  %100 = vmatpush2.msra.mxu0 0.0
  %101 = vmatprep.subr.mxu0 0.0
  %102 = vmatpush2.msra.mxu0 0.0
  %103 = vmatprep.subr.mxu0 0.0
  %104 = vmatpush2.msra.mxu0 0.0
  %105 = vmatprep.subr.mxu0 0.0
  %106 = vmatpush2.msra.mxu0 0.0
  %107 = vmatprep.subr.mxu0 0.0
  %108 = vmatpush2.msra.mxu0 0.0
  %109 = vmatprep.subr.mxu0 0.0
  %110 = vmatpush2.msra.mxu0 0.0
  %111 = vmatprep.subr.mxu0 0.0
  %112 = vmatpush2.msra.mxu0 0.0
  %113 = vmatprep.subr.mxu0 0.0
  %114 = vmatpush2.msra.mxu0 0.0
  %115 = vmatprep.mubr.f32.mxu0 0.0
  %116 = vmatmul.mubr.f32.gmra.mxu0 %v26
  %v117 = vpop.f32.mrf.mxu0
  %v118 = vadd.f32 %v49, %v117
  %v119 = vpop.f32.mrf.mxu0
  %120 = vmatprep.mubr.f32.mxu0 0.0
  %121 = vmatmul.mubr.f32.gmra.mxu0 %v27
  %v122 = vpop.f32.mrf.mxu0
  %v123 = vadd.f32 %v49, %v122
  %v124 = vpop.f32.mrf.mxu0
  %125 = vdwg.mxu0
  %v126 = vmul.f32 %v118, 0.5
  %v127 = vmul.f32 %v123, 0.5
  %v128 = vmul.f32 %v118, 0.70710677
  %v129 = vmul.f32 %v123, 0.70710677
  %v130 = verf.f32.pop %v128
  %v131 = verf.f32.pop %v129
  %v132 = vadd.f32 %v130, 1.0
  %v133 = vadd.f32 %v131, 1.0
  %v134 = vmul.f32 %v126, %v132
  %v135 = vmul.f32 %v127, %v133
  %v136 = vld [vmem:[#allocation2] sm:$0xff]
  %v137 = vld [vmem:[#allocation2 + $0x8] sm:$0xff]
  %v138 = vld [vmem:[%s3] sm:$0xff]
  %v139 = vld [vmem:[%s3 + $0x8] sm:$0xff]
  %v140 = vld [vmem:[%s3 + $0x10] sm:$0xff]
  %v141 = vld [vmem:[%s3 + $0x18] sm:$0xff]
  %v142 = vld [vmem:[%s3 + $0x20] sm:$0xff]
  %v143 = vld [vmem:[%s3 + $0x28] sm:$0xff]
  %v144 = vld [vmem:[%s3 + $0x30] sm:$0xff]
  %v145 = vld [vmem:[%s3 + $0x38] sm:$0xff]
  %v146 = vld [vmem:[%s3 + $0x40] sm:$0xff]
  %v147 = vld [vmem:[%s3 + $0x48] sm:$0xff]
  %v148 = vld [vmem:[%s3 + $0x50] sm:$0xff]
  %v149 = vld [vmem:[%s3 + $0x58] sm:$0xff]
  %v150 = vld [vmem:[%s3 + $0x60] sm:$0xff]
  %v151 = vld [vmem:[%s3 + $0x68] sm:$0xff]
  %v152 = vld [vmem:[%s3 + $0x70] sm:$0xff]
  %v153 = vld [vmem:[%s3 + $0x78] sm:$0xff]
  %154 = vmatprep.subr.mxu0 0.0
  %155 = vmatpush1.msra.mxu0 %v153
  %156 = vmatprep.subr.mxu0 0.0
  %157 = vmatpush1.msra.mxu0 %v152
  %158 = vmatprep.subr.mxu0 0.0
  %159 = vmatpush1.msra.mxu0 %v151
  %160 = vmatprep.subr.mxu0 0.0
  %161 = vmatpush1.msra.mxu0 %v150
  %162 = vmatprep.subr.mxu0 0.0
  %163 = vmatpush1.msra.mxu0 %v149
  %164 = vmatprep.subr.mxu0 0.0
  %165 = vmatpush1.msra.mxu0 %v148
  %166 = vmatprep.subr.mxu0 0.0
  %167 = vmatpush1.msra.mxu0 %v147
  %168 = vmatprep.subr.mxu0 0.0
  %169 = vmatpush1.msra.mxu0 %v146
  %170 = vmatprep.subr.mxu0 0.0
  %171 = vmatpush1.msra.mxu0 %v145
  %172 = vmatprep.subr.mxu0 0.0
  %173 = vmatpush1.msra.mxu0 %v144
  %174 = vmatprep.subr.mxu0 0.0
  %175 = vmatpush1.msra.mxu0 %v143
  %176 = vmatprep.subr.mxu0 0.0
  %177 = vmatpush1.msra.mxu0 %v142
  %178 = vmatprep.subr.mxu0 0.0
  %179 = vmatpush1.msra.mxu0 %v141
  %180 = vmatprep.subr.mxu0 0.0
  %181 = vmatpush1.msra.mxu0 %v140
  %182 = vmatprep.subr.mxu0 0.0
  %183 = vmatpush1.msra.mxu0 %v139
  %184 = vmatprep.subr.mxu0 0.0
  %185 = vmatpush1.msra.mxu0 %v138
  %186 = vmatprep.subr.mxu0 0.0
  %187 = vmatpush2.msra.mxu0 0.0
  %188 = vmatprep.subr.mxu0 0.0
  %189 = vmatpush2.msra.mxu0 0.0
  %190 = vmatprep.subr.mxu0 0.0
  %191 = vmatpush2.msra.mxu0 0.0
  %192 = vmatprep.subr.mxu0 0.0
  %193 = vmatpush2.msra.mxu0 0.0
  %194 = vmatprep.subr.mxu0 0.0
  %195 = vmatpush2.msra.mxu0 0.0
  %196 = vmatprep.subr.mxu0 0.0
  %197 = vmatpush2.msra.mxu0 0.0
  %198 = vmatprep.subr.mxu0 0.0
  %199 = vmatpush2.msra.mxu0 0.0
  %200 = vmatprep.subr.mxu0 0.0
  %201 = vmatpush2.msra.mxu0 0.0
  %202 = vmatprep.subr.mxu0 0.0
  %203 = vmatpush2.msra.mxu0 0.0
  %204 = vmatprep.subr.mxu0 0.0
  %205 = vmatpush2.msra.mxu0 0.0
  %206 = vmatprep.subr.mxu0 0.0
  %207 = vmatpush2.msra.mxu0 0.0
  %208 = vmatprep.subr.mxu0 0.0
  %209 = vmatpush2.msra.mxu0 0.0
  %210 = vmatprep.subr.mxu0 0.0
  %211 = vmatpush2.msra.mxu0 0.0
  %212 = vmatprep.subr.mxu0 0.0
  %213 = vmatpush2.msra.mxu0 0.0
  %214 = vmatprep.subr.mxu0 0.0
  %215 = vmatpush2.msra.mxu0 0.0
  %216 = vmatprep.subr.mxu0 0.0
  %217 = vmatpush2.msra.mxu0 0.0
  %218 = vmatprep.mubr.f32.mxu0 0.0
  %219 = vmatmul.mubr.f32.gmra.mxu0 %v134
  %v220 = vpop.f32.mrf.mxu0
  %v221 = vadd.f32 0.0, %v220
  %v222 = vpop.f32.mrf.mxu0
  %223 = vmatprep.mubr.f32.mxu0 0.0
  %224 = vmatmul.mubr.f32.gmra.mxu0 %v135
  %v225 = vpop.f32.mrf.mxu0
  %v226 = vadd.f32 0.0, %v225
  %v227 = vpop.f32.mrf.mxu0
  %228 = vdwg.mxu0
  %v229 = vadd.f32 %v136, %v221
  %v230 = vadd.f32 %v137, %v226
  %231 = vst [vmem:[#allocation2] sm:$0xff] %v229
  %232 = vst [vmem:[#allocation2 + $0x8] sm:$0xff] %v230
  // Predicated region
  $region26: #{feed_forward.1} parent=0 // pred_check
    %p233 = pneg %p20
  $region27: #{feed_forward.1} parent=0 // pred_check_branch
    %235 = sbr.rel (%p233) target = $region29
  $region28: #{feed_forward.1} parent=0 // pred_region
    %v236 = vld [vmem:[#allocation2] sm:$0xff]
    %v237 = vld [vmem:[#allocation2 + $0x8] sm:$0xff]
    %v238 = vld [vmem:[%s4] sm:$0x1]
    %v240 = vlaneseq
    %v241 = vshrl.u32 %v240, 7
    %v242 = vsub.s32 0, %v241
    %v243 = vrot.slane %v238, %v242
    %v245 = vadd.f32 %v236, %v243
    %v246 = vadd.f32 %v237, %v243
    %247 = vst [vmem:[%s5] sm:$0xff] %v245
    %248 = vst [vmem:[%s5 + $0x8] sm:$0xff] %v246
  $region29: #{feed_forward.1} parent=0 // pred_fallthru
    _
  // Predicated region
  $region30: #{feed_forward.1} parent=0 // pred_check
    _
  $region31: #{feed_forward.1} parent=0 // pred_check_branch
    %250 = sbr.rel (0) target = $region33
  $region32: #{feed_forward.1} parent=0 // pred_region
    _
  $region33: #{feed_forward.1} parent=0 // pred_fallthru
    _
  // Predicated region
  $region34: #{feed_forward.1} parent=0 // pred_check
    _
  $region35: #{feed_forward.1} parent=0 // pred_check_branch
    %252 = sbr.rel (0) target = $region37
  $region36: #{feed_forward.1} parent=0 // pred_region
    _
  $region37: #{feed_forward.1} parent=0 // pred_fallthru
    _

</llo_original>
